<compile_context>
chip_gen: v6e
topology: v6e:2x2x1
jax: 0.10.0
libtpu: 0.0.40
codegen_flags: <defaults>
</compile_context>

<pallas_src>
import jax
import jax.numpy as jnp
from jax.experimental import pallas as pl
from jax.experimental.pallas import tpu as pltpu


# ---------------------------------------------------------------------------
# Kernels
# ---------------------------------------------------------------------------

def proj_kernel(h_ref, w_ref, out_ref):
    """hcat = h @ [W_l | W_r]  (bf16 in, f32 accumulate, bf16 out)."""
    out_ref[...] = jnp.dot(
        h_ref[...], w_ref[...], preferred_element_type=jnp.float32
    ).astype(out_ref.dtype)


def aggregate_kernel(a_ref, hl_ref, hr_ref, b_ref, out_ref, acc_ref):
    """out = relu(A @ hl + hr + b), accumulated over A column tiles (grid axis 1)."""
    k = pl.program_id(1)

    @pl.when(k == 0)
    def _():
        acc_ref[...] = jnp.zeros_like(acc_ref)

    acc_ref[...] += jnp.dot(
        a_ref[...], hl_ref[...], preferred_element_type=jnp.float32)

    @pl.when(k == pl.num_programs(1) - 1)
    def _():
        out = acc_ref[...] + hr_ref[...].astype(jnp.float32) + b_ref[...]
        out_ref[...] = jnp.maximum(out, 0.0).astype(out_ref.dtype)


def head_kernel(h_ref, p_ref, root_ref, wlin_ref, blin_ref, out_ref):
    """out = concat([h[root], P @ h], -1) @ W_lin + b_lin  (root ids from SMEM)."""
    h_b = h_ref[...].astype(jnp.bfloat16)
    pooled = jnp.dot(p_ref[...], h_b, preferred_element_type=jnp.float32)
    # Gather the root rows with scalar SMEM indices (no B x N one-hot matmul).
    rows = [h_ref[pl.ds(root_ref[i], 1), :] for i in range(out_ref.shape[0])]
    root = jnp.concatenate(rows, axis=0).astype(jnp.bfloat16)
    cat = jnp.concatenate([root, pooled.astype(jnp.bfloat16)], axis=-1)
    out_ref[...] = (
        jnp.dot(cat, wlin_ref[...], preferred_element_type=jnp.float32)
        + blin_ref[...])


# ---------------------------------------------------------------------------
# pallas_call wrappers
# ---------------------------------------------------------------------------

def _round_up(n, m):
    return ((n + m - 1) // m) * m


def _pick_tile(n, candidates=(512, 256, 128)):
    # Sized so that bf16 A tiles stay small even on v7x's 64 MiB VMEM.
    for c in candidates:
        if n % c == 0:
            return c
    return n


def _proj(h, wcat, *, tm):
    n, c = h.shape
    two_h = wcat.shape[1]
    return pl.pallas_call(
        proj_kernel,
        out_shape=jax.ShapeDtypeStruct((n, two_h), jnp.bfloat16),
        grid_spec=pltpu.PrefetchScalarGridSpec(
            num_scalar_prefetch=0,
            grid=(n // tm,),
            in_specs=[
                pl.BlockSpec((tm, c), lambda i: (i, 0)),
                pl.BlockSpec((c, two_h), lambda i: (0, 0)),
            ],
            out_specs=pl.BlockSpec((tm, two_h), lambda i: (i, 0)),
        ),
        compiler_params=pltpu.CompilerParams(
            dimension_semantics=("parallel",)),
        cost_estimate=pl.CostEstimate(
            flops=2 * n * c * two_h,
            transcendentals=0,
            bytes_accessed=2 * (n * c + c * two_h + n * two_h)),
    )(h, wcat)


def _aggregate(a, hcat, bias, *, tm, tk, out_dtype):
    n = a.shape[0]
    h_pad = hcat.shape[1] // 2
    return pl.pallas_call(
        aggregate_kernel,
        out_shape=jax.ShapeDtypeStruct((n, h_pad), out_dtype),
        grid_spec=pltpu.PrefetchScalarGridSpec(
            num_scalar_prefetch=0,
            grid=(n // tm, n // tk),          # (row tiles, reduction tiles)
            in_specs=[
                pl.BlockSpec((tm, tk), lambda i, k: (i, k)),      # A tile
                pl.BlockSpec((tk, h_pad), lambda i, k: (k, 0)),   # hcat[:, :H]
                pl.BlockSpec((tm, h_pad), lambda i, k: (i, 1)),   # hcat[:, H:]
                pl.BlockSpec((1, h_pad), lambda i, k: (0, 0)),    # bias
            ],
            out_specs=pl.BlockSpec((tm, h_pad), lambda i, k: (i, 0)),
            scratch_shapes=[pltpu.VMEM((tm, h_pad), jnp.float32)],
        ),
        compiler_params=pltpu.CompilerParams(
            dimension_semantics=("parallel", "arbitrary")),
        cost_estimate=pl.CostEstimate(
            flops=2 * n * n * h_pad,
            transcendentals=0,
            bytes_accessed=2 * (n * n + 2 * n * h_pad) + 2 * n * h_pad),
    )(a, hcat, hcat, bias)


def _head(h, p, root_ids, wlin, blin):
    b_pad = p.shape[0]
    o_pad = wlin.shape[1]
    vmem = pl.BlockSpec(memory_space=pltpu.MemorySpace.VMEM)
    smem = pl.BlockSpec(memory_space=pltpu.MemorySpace.SMEM)
    return pl.pallas_call(
        head_kernel,
        out_shape=jax.ShapeDtypeStruct((b_pad, o_pad), jnp.float32),
        in_specs=[vmem, vmem, smem, vmem, vmem],
        out_specs=vmem,
    )(h, p, root_ids, wlin, blin)


# ---------------------------------------------------------------------------
# Plain-JAX glue: padding, dense graph operators, fused/padded parameters
# ---------------------------------------------------------------------------

def prepare_graph(x, edge_index, batch, root_n_id, num_graphs):
    n, c_in = x.shape
    n_pad = _round_up(n, 128)
    c_pad = _round_up(c_in, 128)
    b_pad = _round_up(num_graphs, 8)

    src, dst = edge_index[0], edge_index[1]
    ones = jnp.ones(src.shape[0], jnp.float32)
    deg = jnp.zeros((n,), jnp.float32).at[dst].add(ones)
    a = jnp.zeros((n, n), jnp.float32).at[dst, src].add(1.0)
    a = a / jnp.maximum(deg, 1.0)[:, None]
    a_pad = jnp.zeros((n_pad, n_pad), jnp.float32).at[:n, :n].set(a)
    a_pad = a_pad.astype(jnp.bfloat16)

    counts = jnp.zeros((num_graphs,), jnp.float32).at[batch].add(
        jnp.ones(n, jnp.float32))
    p = (jax.nn.one_hot(batch, num_graphs, dtype=jnp.float32).T
         / jnp.maximum(counts, 1.0)[:, None])
    p_pad = jnp.zeros((b_pad, n_pad), jnp.float32).at[:num_graphs, :n].set(p)
    p_pad = p_pad.astype(jnp.bfloat16)

    x_pad = jnp.zeros((n_pad, c_pad), jnp.float32).at[:n, :c_in].set(x)
    x_pad = x_pad.astype(jnp.bfloat16)

    roots = jnp.zeros((b_pad,), jnp.int32).at[:num_graphs].set(
        root_n_id.astype(jnp.int32))
    return x_pad, a_pad, p_pad, roots


def prepare_params(params, c_in, hidden, out_channels):
    c_pad = _round_up(c_in, 128)
    h_pad = _round_up(hidden, 128)
    o_pad = _round_up(out_channels, 128)

    def fuse(wl, wr, fin, fin_pad):
        w = jnp.zeros((fin_pad, 2 * h_pad), jnp.float32)
        w = w.at[:fin, :hidden].set(wl)
        w = w.at[:fin, h_pad:h_pad + hidden].set(wr)
        return w.astype(jnp.bfloat16)

    def pad_bias(b, width):
        out = jnp.zeros((1, width), jnp.float32)
        return out.at[:, :b.shape[-1]].set(b)

    wlin = jnp.zeros((2 * h_pad, o_pad), jnp.float32)
    wlin = wlin.at[:hidden, :out_channels].set(params["wlin_root"])
    wlin = wlin.at[h_pad:h_pad + hidden, :out_channels].set(params["wlin_pool"])

    return {
        "w1": fuse(params["w1l"], params["w1r"], c_in, c_pad),
        "w2": fuse(params["w2l"], params["w2r"], hidden, h_pad),
        "w3": fuse(params["w3l"], params["w3r"], hidden, h_pad),
        "b1": pad_bias(params["b1"], h_pad),
        "b2": pad_bias(params["b2"], h_pad),
        "b3": pad_bias(params["b3"], h_pad),
        "wlin": wlin.astype(jnp.bfloat16),
        "blin": pad_bias(params["blin"], o_pad),
    }


def graphsage_forward(x, edge_index, batch, root_n_id, params, num_graphs):
    _, c_in = x.shape
    hidden = params["w1l"].shape[1]
    out_channels = params["wlin_root"].shape[1]

    xp, a, p, roots = prepare_graph(x, edge_index, batch, root_n_id, num_graphs)
    pp = prepare_params(params, c_in, hidden, out_channels)

    n_pad = a.shape[0]
    tm = _pick_tile(n_pad)
    tk = _pick_tile(n_pad)

    h = xp
    layers = ((pp["w1"], pp["b1"], False),
              (pp["w2"], pp["b2"], False),
              (pp["w3"], pp["b3"], True))
    for w, b, last in layers:
        hcat = _proj(h, w, tm=tm)                        # [N_pad, 2*H_pad] bf16
        h = _aggregate(a, hcat, b, tm=tm, tk=tk,
                       out_dtype=jnp.float32 if last else jnp.bfloat16)
        # F.dropout(..., p=0.3): identity (eval semantics).

    out_pad = _head(h, p, roots, pp["wlin"], pp["blin"])  # [B_pad, O_pad] f32
    return out_pad[:num_graphs, :out_channels]


def init_params(key, in_channels, hidden, out_channels):
    ks = jax.random.split(key, 8)

    def lin(k, fin, fout, scale=0.1):
        return scale * jax.random.normal(k, (fin, fout), jnp.float32)

    return {
        "w1l": lin(ks[0], in_channels, hidden), "w1r": lin(ks[1], in_channels, hidden),
        "b1": 0.01 * jnp.ones((1, hidden), jnp.float32),
        "w2l": lin(ks[2], hidden, hidden), "w2r": lin(ks[3], hidden, hidden),
        "b2": 0.01 * jnp.ones((1, hidden), jnp.float32),
        "w3l": lin(ks[4], hidden, hidden), "w3r": lin(ks[5], hidden, hidden),
        "b3": 0.01 * jnp.ones((1, hidden), jnp.float32),
        # Linear(2*hidden, out): stored split along the concat axis.
        "wlin_root": lin(ks[6], hidden, out_channels),
        "wlin_pool": lin(ks[7], hidden, out_channels),
        "blin": 0.01 * jnp.ones((1, out_channels), jnp.float32),
    }


if __name__ == "__main__":
    key = jax.random.PRNGKey(0)
    N, E, B = 64, 256, 4          # nodes, edges, graphs in the shadow batch
    C_IN, HID, C_OUT = 32, 32, 8

    k_x, k_src, k_dst, k_root, k_p = jax.random.split(key, 5)
    x = jax.random.normal(k_x, (N, C_IN), jnp.float32)
    src = jax.random.randint(k_src, (E,), 0, N)
    dst = jax.random.randint(k_dst, (E,), 0, N)
    edge_index = jnp.stack([src, dst], axis=0)
    # contiguous batch assignment: 16 nodes per graph
    batch = jnp.repeat(jnp.arange(B, dtype=jnp.int32), N // B)
    # one root node per graph, inside that graph's node range
    root_n_id = jnp.arange(B, dtype=jnp.int32) * (N // B) + jax.random.randint(
        k_root, (B,), 0, N // B)

    params = init_params(k_p, C_IN, HID, C_OUT)

    out = graphsage_forward(x, edge_index, batch, root_n_id, params, num_graphs=B)
    out = jax.block_until_ready(out)
    assert out.shape == (B, C_OUT) and out.dtype == jnp.float32
    print("KERNEL_OK")
</pallas_src>

<mosaic_0001>
module attributes {stable_mosaic.version = 11 : i64} {
  func.func @proj_kernel(%arg0: i32, %arg1: memref<128x128xbf16, #tpu.memory_space<vmem>>, %arg2: memref<128x256xbf16, #tpu.memory_space<vmem>>, %arg3: memref<128x256xbf16, #tpu.memory_space<vmem>>) attributes {dimension_semantics = [#tpu.dimension_semantics<parallel>], iteration_bounds = array<i64: 1>, scalar_prefetch = 0 : i64, scratch_operands = 0 : i64, tpu.core_type = #tpu.core_type<tc>, window_params = [{transform_indices = @transform_0, window_bounds = array<i64: 128, 128>}, {pipeline_mode = #tpu.pipeline_mode<synchronous>, transform_indices = @transform_1, window_bounds = array<i64: 128, 256>}, {transform_indices = @transform_2, window_bounds = array<i64: 128, 256>}]} {
    %c0 = arith.constant 0 : index
    %c0_0 = arith.constant 0 : index
    %0 = vector.load %arg1[%c0, %c0_0] : memref<128x128xbf16, #tpu.memory_space<vmem>>, vector<128x128xbf16>
    %c0_1 = arith.constant 0 : index
    %c0_2 = arith.constant 0 : index
    %1 = vector.load %arg2[%c0_1, %c0_2] : memref<128x256xbf16, #tpu.memory_space<vmem>>, vector<128x256xbf16>
    %cst = arith.constant dense<0.000000e+00> : vector<128x256xf32>
    %2 = tpu.matmul %0, %1, %cst {dimension_numbers = #tpu.dot_dimension_numbers<[1], [0], [0], [1], [0, 0, 1, 1], [], []>} : vector<128x128xbf16>, vector<128x256xbf16>, vector<128x256xf32> -> vector<128x256xf32>
    %3 = arith.truncf %2 : vector<128x256xf32> to vector<128x256xbf16>
    %c0_3 = arith.constant 0 : index
    %c0_4 = arith.constant 0 : index
    %4 = vector.load %arg3[%c0_3, %c0_4] : memref<128x256xbf16, #tpu.memory_space<vmem>>, vector<128x256xbf16>
    tpu.vector_store %arg3[%c0_3, %c0_4], %3 {strides = array<i32>} : memref<128x256xbf16, #tpu.memory_space<vmem>>, vector<128x256xbf16>,
    return
  }
  func.func @transform_0(%arg0: i32) -> (i32, i32) {
    %c0_i32 = arith.constant 0 : i32
    %c0_i32_0 = arith.constant 0 : i32
    return %arg0, %c0_i32 : i32, i32
  }
  func.func @transform_1(%arg0: i32) -> (i32, i32) {
    %c0_i32 = arith.constant 0 : i32
    %c0_i32_0 = arith.constant 0 : i32
    %c0_i32_1 = arith.constant 0 : i32
    return %c0_i32, %c0_i32_0 : i32, i32
  }
  func.func @transform_2(%arg0: i32) -> (i32, i32) {
    %c0_i32 = arith.constant 0 : i32
    %c0_i32_0 = arith.constant 0 : i32
    return %arg0, %c0_i32 : i32, i32
  }
}

</mosaic_0001>

<llo_original>
// kernel: tpu_custom_call.1
$region0: #{tpu_custom_call.1}
  #allocation0 [shape = 'u32[]', space=smem, size = 0x4, offset = 0x4, fixed_abs, tag = 'smem constant byte address 0x4 - core index']
  #allocation1 [shape = 'u32[144,128]{1,0:T(1,128)}', space=vmem, size = 0x12000, scoped, tag = 'internal scratch']
  %s0 = inlined_call_operand.hbm [shape: bf16[128,128], index: 0, kind: input, shape index: {}]
  %s1 = inlined_call_operand.hbm [shape: bf16[128,256], index: 1, kind: input, shape index: {}]
  %s2 = inlined_call_operand.hbm [shape: bf16[128,256], index: 2, kind: output, shape index: {}]
  %s3 = sld [smem:[#allocation0]]
  $region26: #{tpu_custom_call.1} parent=0
    _
  %s5 = ssub.s32 1, %s3
  %s6 = scalar_select 0, %s5, %s3
  $region1: #{tpu_custom_call.1} parent=0
    #allocation2 [shape = 'u8[32768]{0}', space=vmem, size = 0x8000, scoped, tag = 'input window, operand 0, single buffered']
    #allocation3 [shape = 's32[1]{0}', space=sflag, size = 0x4, scoped, tag = 'scoped memory for tpu_custom_call.1']
    #allocation4 [shape = 's32[1]{0}', space=sflag, size = 0x4, scoped, tag = 'scoped memory for tpu_custom_call.1']
    #allocation5 [shape = 'u8[65536]{0}', space=vmem, size = 0x10000, scoped, tag = 'input window, operand 1, single buffered']
    #allocation6 [shape = 's32[1]{0}', space=sflag, size = 0x4, scoped, tag = 'scoped memory for tpu_custom_call.1']
    #allocation7 [shape = 'u8[65536]{0}', space=vmem, size = 0x10000, scoped, tag = 'output window, operand 0, single buffered']
    %7 = vsyncpa [#allocation3], 0
    %8 = vsyncpa [#allocation6], 0
    %9 = vsyncpa [#allocation4], 0
    // Predicated region
    $region2: #{tpu_custom_call.1} parent=1 // pred_check
      _
    $region3: #{tpu_custom_call.1} parent=1 // pred_check_branch
      %11 = sbr.rel (0) target = $region5
    $region4: #{tpu_custom_call.1} parent=1 // pred_region
      %s13 = ssub.s32 1024, 1024
      %14 = vsyncadd [#allocation3], %s13
      %s15 = sshll.u32 [#allocation2], 4
      %s16 = int_to_ptr.vmem [resolvable:$true] %s15
      %21 = dma.hbm_to_vmem [thread:$0]  %s0, 1024, %s16, [#allocation3], 64, 64, 4
    $region5: #{tpu_custom_call.1} parent=1 // pred_fallthru
      _
    // Predicated region
    $region6: #{tpu_custom_call.1} parent=1 // pred_check
      _
    $region7: #{tpu_custom_call.1} parent=1 // pred_check_branch
      %23 = sbr.rel (0) target = $region9
    $region8: #{tpu_custom_call.1} parent=1 // pred_region
      %s25 = ssub.s32 2048, 2048
      %26 = vsyncadd [#allocation6], %s25
      %s27 = sshll.u32 [#allocation5], 4
      %s28 = int_to_ptr.vmem [resolvable:$true] %s27
      %33 = dma.hbm_to_vmem [thread:$0]  %s1, 2048, %s28, [#allocation6], 128, 128, 8
    $region9: #{tpu_custom_call.1} parent=1 // pred_fallthru
      _
    // Predicated region
    $region10: #{tpu_custom_call.1} parent=1 // pred_check
      _
    $region11: #{tpu_custom_call.1} parent=1 // pred_check_branch
      %35 = sbr.rel (0) target = $region13
    $region12: #{tpu_custom_call.1} parent=1 // pred_region
      %36 = dma.done [#allocation3], 1024
    $region13: #{tpu_custom_call.1} parent=1 // pred_fallthru
      _
    // Predicated region
    $region14: #{tpu_custom_call.1} parent=1 // pred_check
      _
    $region15: #{tpu_custom_call.1} parent=1 // pred_check_branch
      %38 = sbr.rel (0) target = $region17
    $region16: #{tpu_custom_call.1} parent=1 // pred_region
      %39 = dma.done [#allocation6], 2048
    $region17: #{tpu_custom_call.1} parent=1 // pred_fallthru
      _
    %v41 = vld [vmem:[#allocation2] sm:$0xf]
    %v42 = vld [vmem:[#allocation2 + $0x4] sm:$0xf]
    %v43 = vld [vmem:[#allocation2 + $0x8] sm:$0xf]
    %v44 = vld [vmem:[#allocation2 + $0xc] sm:$0xf]
    %v45 = vld [vmem:[#allocation2 + $0x10] sm:$0xf]
    %v46 = vld [vmem:[#allocation2 + $0x14] sm:$0xf]
    %v47 = vld [vmem:[#allocation2 + $0x18] sm:$0xf]
    %v48 = vld [vmem:[#allocation2 + $0x1c] sm:$0xf]
    %v49 = vld [vmem:[#allocation2 + $0x20] sm:$0xf]
    %v50 = vld [vmem:[#allocation2 + $0x24] sm:$0xf]
    %v51 = vld [vmem:[#allocation2 + $0x28] sm:$0xf]
    %v52 = vld [vmem:[#allocation2 + $0x2c] sm:$0xf]
    %v53 = vld [vmem:[#allocation2 + $0x30] sm:$0xf]
    %v54 = vld [vmem:[#allocation2 + $0x34] sm:$0xf]
    %v55 = vld [vmem:[#allocation2 + $0x38] sm:$0xf]
    %v56 = vld [vmem:[#allocation2 + $0x3c] sm:$0xf]
    %v57 = vld [vmem:[#allocation5] sm:$0xff]
    %v58 = vld [vmem:[#allocation5 + $0x8] sm:$0xff]
    %v59 = vld [vmem:[#allocation5 + $0x10] sm:$0xff]
    %v60 = vld [vmem:[#allocation5 + $0x18] sm:$0xff]
    %v61 = vld [vmem:[#allocation5 + $0x20] sm:$0xff]
    %v62 = vld [vmem:[#allocation5 + $0x28] sm:$0xff]
    %v63 = vld [vmem:[#allocation5 + $0x30] sm:$0xff]
    %v64 = vld [vmem:[#allocation5 + $0x38] sm:$0xff]
    %v65 = vld [vmem:[#allocation5 + $0x40] sm:$0xff]
    %v66 = vld [vmem:[#allocation5 + $0x48] sm:$0xff]
    %v67 = vld [vmem:[#allocation5 + $0x50] sm:$0xff]
    %v68 = vld [vmem:[#allocation5 + $0x58] sm:$0xff]
    %v69 = vld [vmem:[#allocation5 + $0x60] sm:$0xff]
    %v70 = vld [vmem:[#allocation5 + $0x68] sm:$0xff]
    %v71 = vld [vmem:[#allocation5 + $0x70] sm:$0xff]
    %v72 = vld [vmem:[#allocation5 + $0x78] sm:$0xff]
    %v89 = vunpack.c.l.b16 %v41
    %v90 = vunpack.c.l.b16 %v42
    %v91 = vunpack.c.l.b16 %v43
    %v92 = vunpack.c.l.b16 %v44
    %v93 = vunpack.c.l.b16 %v45
    %v94 = vunpack.c.l.b16 %v46
    %v95 = vunpack.c.l.b16 %v47
    %v96 = vunpack.c.l.b16 %v48
    %v97 = vunpack.c.l.b16 %v49
    %v98 = vunpack.c.l.b16 %v50
    %v99 = vunpack.c.l.b16 %v51
    %v100 = vunpack.c.l.b16 %v52
    %v101 = vunpack.c.l.b16 %v53
    %v102 = vunpack.c.l.b16 %v54
    %v103 = vunpack.c.l.b16 %v55
    %v104 = vunpack.c.l.b16 %v56
    %v105 = vpack.c.b16 %v90, %v89
    %v106 = vpack.c.b16 %v92, %v91
    %v107 = vpack.c.b16 %v94, %v93
    %v108 = vpack.c.b16 %v96, %v95
    %v109 = vpack.c.b16 %v98, %v97
    %v110 = vpack.c.b16 %v100, %v99
    %v111 = vpack.c.b16 %v102, %v101
    %v112 = vpack.c.b16 %v104, %v103
    %v137 = vunpack.c.l.b16 %v57
    %v138 = vunpack.c.h.b16 %v57
    %v139 = vunpack.c.l.b16 %v58
    %v140 = vunpack.c.h.b16 %v58
    %v141 = vunpack.c.l.b16 %v59
    %v142 = vunpack.c.h.b16 %v59
    %v143 = vunpack.c.l.b16 %v60
    %v144 = vunpack.c.h.b16 %v60
    %v145 = vunpack.c.l.b16 %v61
    %v146 = vunpack.c.h.b16 %v61
    %v147 = vunpack.c.l.b16 %v62
    %v148 = vunpack.c.h.b16 %v62
    %v149 = vunpack.c.l.b16 %v63
    %v150 = vunpack.c.h.b16 %v63
    %v151 = vunpack.c.l.b16 %v64
    %v152 = vunpack.c.h.b16 %v64
    %v153 = vunpack.c.l.b16 %v65
    %v154 = vunpack.c.h.b16 %v65
    %v155 = vunpack.c.l.b16 %v66
    %v156 = vunpack.c.h.b16 %v66
    %v157 = vunpack.c.l.b16 %v67
    %v158 = vunpack.c.h.b16 %v67
    %v159 = vunpack.c.l.b16 %v68
    %v160 = vunpack.c.h.b16 %v68
    %v161 = vunpack.c.l.b16 %v69
    %v162 = vunpack.c.h.b16 %v69
    %v163 = vunpack.c.l.b16 %v70
    %v164 = vunpack.c.h.b16 %v70
    %v165 = vunpack.c.l.b16 %v71
    %v166 = vunpack.c.h.b16 %v71
    %v167 = vunpack.c.l.b16 %v72
    %v168 = vunpack.c.h.b16 %v72
    %v169 = vpack.c.b16 %v139, %v137
    %v170 = vpack.c.b16 %v140, %v138
    %v171 = vpack.c.b16 %v143, %v141
    %v172 = vpack.c.b16 %v144, %v142
    %v173 = vpack.c.b16 %v147, %v145
    %v174 = vpack.c.b16 %v148, %v146
    %v175 = vpack.c.b16 %v151, %v149
    %v176 = vpack.c.b16 %v152, %v150
    %v177 = vpack.c.b16 %v155, %v153
    %v178 = vpack.c.b16 %v156, %v154
    %v179 = vpack.c.b16 %v159, %v157
    %v180 = vpack.c.b16 %v160, %v158
    %v181 = vpack.c.b16 %v163, %v161
    %v182 = vpack.c.b16 %v164, %v162
    %v183 = vpack.c.b16 %v167, %v165
    %v184 = vpack.c.b16 %v168, %v166
    %201 = vmatprep.subr.bf16.mxu0 %v184
    %202 = vmatpush1.bf16.msra.mxu0 %v183
    %203 = vmatprep.subr.bf16.mxu0 %v182
    %204 = vmatpush1.bf16.msra.mxu0 %v181
    %205 = vmatprep.subr.bf16.mxu0 %v180
    %206 = vmatpush1.bf16.msra.mxu0 %v179
    %207 = vmatprep.subr.bf16.mxu0 %v178
    %208 = vmatpush1.bf16.msra.mxu0 %v177
    %209 = vmatprep.subr.bf16.mxu0 %v176
    %210 = vmatpush1.bf16.msra.mxu0 %v175
    %211 = vmatprep.subr.bf16.mxu0 %v174
    %212 = vmatpush1.bf16.msra.mxu0 %v173
    %213 = vmatprep.subr.bf16.mxu0 %v172
    %214 = vmatpush1.bf16.msra.mxu0 %v171
    %215 = vmatprep.subr.bf16.mxu0 %v170
    %216 = vmatpush1.bf16.msra.mxu0 %v169
    %217 = vmatprep.subr.bf16.mxu0 0
    %218 = vmatpush2.bf16.msra.mxu0 0
    %219 = vmatprep.subr.bf16.mxu0 0
    %220 = vmatpush2.bf16.msra.mxu0 0
    %221 = vmatprep.subr.bf16.mxu0 0
    %222 = vmatpush2.bf16.msra.mxu0 0
    %223 = vmatprep.subr.bf16.mxu0 0
    %224 = vmatpush2.bf16.msra.mxu0 0
    %225 = vmatprep.subr.bf16.mxu0 0
    %226 = vmatpush2.bf16.msra.mxu0 0
    %227 = vmatprep.subr.bf16.mxu0 0
    %228 = vmatpush2.bf16.msra.mxu0 0
    %229 = vmatprep.subr.bf16.mxu0 0
    %230 = vmatpush2.bf16.msra.mxu0 0
    %231 = vmatprep.subr.bf16.mxu0 0
    %232 = vmatpush2.bf16.msra.mxu0 0
    %233 = vmatprep.mubr.bf16.mxu0 0
    %234 = vmatmul.mubr.bf16.gmra.mxu0 %v105
    %v235 = vpop.f32.mrf.mxu0
    %v236 = vadd.f32 0.0, %v235
    %v237 = vpop.f32.mrf.mxu0
    %v238 = vadd.f32 0.0, %v237
    %v239 = vpop.f32.mrf.mxu0
    %v240 = vadd.f32 0.0, %v239
    %v241 = vpop.f32.mrf.mxu0
    %v242 = vadd.f32 0.0, %v241
    %243 = vmatprep.mubr.bf16.mxu0 0
    %244 = vmatmul.mubr.bf16.gmra.mxu0 %v106
    %v245 = vpop.f32.mrf.mxu0
    %v246 = vadd.f32 0.0, %v245
    %v247 = vpop.f32.mrf.mxu0
    %v248 = vadd.f32 0.0, %v247
    %v249 = vpop.f32.mrf.mxu0
    %v250 = vadd.f32 0.0, %v249
    %v251 = vpop.f32.mrf.mxu0
    %v252 = vadd.f32 0.0, %v251
    %253 = vmatprep.mubr.bf16.mxu0 0
    %254 = vmatmul.mubr.bf16.gmra.mxu0 %v107
    %v255 = vpop.f32.mrf.mxu0
    %v256 = vadd.f32 0.0, %v255
    %v257 = vpop.f32.mrf.mxu0
    %v258 = vadd.f32 0.0, %v257
    %v259 = vpop.f32.mrf.mxu0
    %v260 = vadd.f32 0.0, %v259
    %v261 = vpop.f32.mrf.mxu0
    %v262 = vadd.f32 0.0, %v261
    %263 = vmatprep.mubr.bf16.mxu0 0
    %264 = vmatmul.mubr.bf16.gmra.mxu0 %v108
    %v265 = vpop.f32.mrf.mxu0
    %v266 = vadd.f32 0.0, %v265
    %v267 = vpop.f32.mrf.mxu0
    %v268 = vadd.f32 0.0, %v267
    %v269 = vpop.f32.mrf.mxu0
    %v270 = vadd.f32 0.0, %v269
    %v271 = vpop.f32.mrf.mxu0
    %v272 = vadd.f32 0.0, %v271
    %273 = vmatprep.mubr.bf16.mxu0 0
    %274 = vmatmul.mubr.bf16.gmra.mxu0 %v109
    %v275 = vpop.f32.mrf.mxu0
    %v276 = vadd.f32 0.0, %v275
    %v277 = vpop.f32.mrf.mxu0
    %v278 = vadd.f32 0.0, %v277
    %v279 = vpop.f32.mrf.mxu0
    %v280 = vadd.f32 0.0, %v279
    %v281 = vpop.f32.mrf.mxu0
    %v282 = vadd.f32 0.0, %v281
    %283 = vmatprep.mubr.bf16.mxu0 0
    %284 = vmatmul.mubr.bf16.gmra.mxu0 %v110
    %v285 = vpop.f32.mrf.mxu0
    %v286 = vadd.f32 0.0, %v285
    %v287 = vpop.f32.mrf.mxu0
    %v288 = vadd.f32 0.0, %v287
    %v289 = vpop.f32.mrf.mxu0
    %v290 = vadd.f32 0.0, %v289
    %v291 = vpop.f32.mrf.mxu0
    %v292 = vadd.f32 0.0, %v291
    %293 = vmatprep.mubr.bf16.mxu0 0
    %294 = vmatmul.mubr.bf16.gmra.mxu0 %v111
    %v295 = vpop.f32.mrf.mxu0
    %v296 = vadd.f32 0.0, %v295
    %v297 = vpop.f32.mrf.mxu0
    %v298 = vadd.f32 0.0, %v297
    %v299 = vpop.f32.mrf.mxu0
    %v300 = vadd.f32 0.0, %v299
    %v301 = vpop.f32.mrf.mxu0
    %v302 = vadd.f32 0.0, %v301
    %303 = vmatprep.mubr.bf16.mxu0 0
    %304 = vmatmul.mubr.bf16.gmra.mxu0 %v112
    %v305 = vpop.f32.mrf.mxu0
    %v306 = vadd.f32 0.0, %v305
    %v307 = vpop.f32.mrf.mxu0
    %v308 = vadd.f32 0.0, %v307
    %v309 = vpop.f32.mrf.mxu0
    %v310 = vadd.f32 0.0, %v309
    %v311 = vpop.f32.mrf.mxu0
    %v312 = vadd.f32 0.0, %v311
    %313 = vdwg.mxu0
    %v314 = vpack.c.bf16 %v240, %v236
    %v315 = vpack.c.bf16 %v242, %v238
    %v316 = vpack.c.bf16 %v250, %v246
    %v317 = vpack.c.bf16 %v252, %v248
    %v318 = vpack.c.bf16 %v260, %v256
    %v319 = vpack.c.bf16 %v262, %v258
    %v320 = vpack.c.bf16 %v270, %v266
    %v321 = vpack.c.bf16 %v272, %v268
    %v322 = vpack.c.bf16 %v280, %v276
    %v323 = vpack.c.bf16 %v282, %v278
    %v324 = vpack.c.bf16 %v290, %v286
    %v325 = vpack.c.bf16 %v292, %v288
    %v326 = vpack.c.bf16 %v300, %v296
    %v327 = vpack.c.bf16 %v302, %v298
    %v328 = vpack.c.bf16 %v310, %v306
    %v329 = vpack.c.bf16 %v312, %v308
    %v346 = vunpack.c.l.b16 %v314
    %v347 = vunpack.c.l.b16 %v315
    %v348 = vunpack.c.h.b16 %v314
    %v349 = vunpack.c.h.b16 %v315
    %v350 = vunpack.c.l.b16 %v316
    %v351 = vunpack.c.l.b16 %v317
    %v352 = vunpack.c.h.b16 %v316
    %v353 = vunpack.c.h.b16 %v317
    %v354 = vunpack.c.l.b16 %v318
    %v355 = vunpack.c.l.b16 %v319
    %v356 = vunpack.c.h.b16 %v318
    %v357 = vunpack.c.h.b16 %v319
    %v358 = vunpack.c.l.b16 %v320
    %v359 = vunpack.c.l.b16 %v321
    %v360 = vunpack.c.h.b16 %v320
    %v361 = vunpack.c.h.b16 %v321
    %v362 = vunpack.c.l.b16 %v322
    %v363 = vunpack.c.l.b16 %v323
    %v364 = vunpack.c.h.b16 %v322
    %v365 = vunpack.c.h.b16 %v323
    %v366 = vunpack.c.l.b16 %v324
    %v367 = vunpack.c.l.b16 %v325
    %v368 = vunpack.c.h.b16 %v324
    %v369 = vunpack.c.h.b16 %v325
    %v370 = vunpack.c.l.b16 %v326
    %v371 = vunpack.c.l.b16 %v327
    %v372 = vunpack.c.h.b16 %v326
    %v373 = vunpack.c.h.b16 %v327
    %v374 = vunpack.c.l.b16 %v328
    %v375 = vunpack.c.l.b16 %v329
    %v376 = vunpack.c.h.b16 %v328
    %v377 = vunpack.c.h.b16 %v329
    %v378 = vpack.c.b16 %v347, %v346
    %v379 = vpack.c.b16 %v349, %v348
    %v380 = vpack.c.b16 %v351, %v350
    %v381 = vpack.c.b16 %v353, %v352
    %v382 = vpack.c.b16 %v355, %v354
    %v383 = vpack.c.b16 %v357, %v356
    %v384 = vpack.c.b16 %v359, %v358
    %v385 = vpack.c.b16 %v361, %v360
    %v386 = vpack.c.b16 %v363, %v362
    %v387 = vpack.c.b16 %v365, %v364
    %v388 = vpack.c.b16 %v367, %v366
    %v389 = vpack.c.b16 %v369, %v368
    %v390 = vpack.c.b16 %v371, %v370
    %v391 = vpack.c.b16 %v373, %v372
    %v392 = vpack.c.b16 %v375, %v374
    %v393 = vpack.c.b16 %v377, %v376
    %410 = vst [vmem:[#allocation7] sm:$0xff] %v378
    %411 = vst [vmem:[#allocation7 + $0x8] sm:$0xff] %v379
    %412 = vst [vmem:[#allocation7 + $0x10] sm:$0xff] %v380
    %413 = vst [vmem:[#allocation7 + $0x18] sm:$0xff] %v381
    %414 = vst [vmem:[#allocation7 + $0x20] sm:$0xff] %v382
    %415 = vst [vmem:[#allocation7 + $0x28] sm:$0xff] %v383
    %416 = vst [vmem:[#allocation7 + $0x30] sm:$0xff] %v384
    %417 = vst [vmem:[#allocation7 + $0x38] sm:$0xff] %v385
    %418 = vst [vmem:[#allocation7 + $0x40] sm:$0xff] %v386
    %419 = vst [vmem:[#allocation7 + $0x48] sm:$0xff] %v387
    %420 = vst [vmem:[#allocation7 + $0x50] sm:$0xff] %v388
    %421 = vst [vmem:[#allocation7 + $0x58] sm:$0xff] %v389
    %422 = vst [vmem:[#allocation7 + $0x60] sm:$0xff] %v390
    %423 = vst [vmem:[#allocation7 + $0x68] sm:$0xff] %v391
    %424 = vst [vmem:[#allocation7 + $0x70] sm:$0xff] %v392
    %425 = vst [vmem:[#allocation7 + $0x78] sm:$0xff] %v393
    // Predicated region
    $region18: #{tpu_custom_call.1} parent=1 // pred_check
      _
    $region19: #{tpu_custom_call.1} parent=1 // pred_check_branch
      %427 = sbr.rel (0) target = $region21
    $region20: #{tpu_custom_call.1} parent=1 // pred_region
      %s429 = ssub.s32 2048, 2048
      %430 = vsyncadd [#allocation4], %s429
      %s431 = sshll.u32 [#allocation7], 4
      %s432 = int_to_ptr.vmem [resolvable:$true] %s431
      %437 = dma.vmem_to_hbm [thread:$0]  %s432, 2048, %s2, [#allocation4], 128, 128, 8
    $region21: #{tpu_custom_call.1} parent=1 // pred_fallthru
      _
    // Predicated region
    $region22: #{tpu_custom_call.1} parent=1 // pred_check
      _
    $region23: #{tpu_custom_call.1} parent=1 // pred_check_branch
      %439 = sbr.rel (0) target = $region25
    $region24: #{tpu_custom_call.1} parent=1 // pred_region
      %440 = dma.done [#allocation4], 2048
    $region25: #{tpu_custom_call.1} parent=1 // pred_fallthru
      _
    %441 = vsyncpa [#allocation3], 1
    %442 = vsyncpa [#allocation6], 1
    %443 = vsyncpa [#allocation4], 1

</llo_original>
